<compile_context>
chip_gen: v7x
topology: tpu7x:2x2x1
jax: 0.10.0
libtpu: 0.0.40
codegen_flags: <defaults>
</compile_context>

<pallas_src>
import math

import jax
import jax.numpy as jnp
from jax.experimental import pallas as pl
from jax.experimental.pallas import tpu as pltpu


def make_positional_encoding_table(d_model, max_len=5000, dtype=jnp.float32):
    """Matches the PyTorch __init__: interleaved sin/cos table of shape (max_len, d_model)."""
    assert d_model % 2 == 0, "interleaved sin/cos table requires an even d_model"
    position = jnp.arange(max_len, dtype=jnp.float32)[:, None]
    div_term = jnp.exp(
        jnp.arange(0, d_model, 2, dtype=jnp.float32) * (-math.log(10000.0) / d_model)
    )
    angles = position * div_term  # (max_len, d_model // 2)
    pe = jnp.zeros((max_len, d_model), dtype=jnp.float32)
    pe = pe.at[:, 0::2].set(jnp.sin(angles))
    pe = pe.at[:, 1::2].set(jnp.cos(angles))
    return pe.astype(dtype)


def _sublane_quantum(dtype):
    # Sub-32-bit dtypes pack along sublanes: 8 rows f32, 16 bf16, 32 int8/fp8.
    return max(8, 32 // max(1, jnp.dtype(dtype).itemsize))


def _add_pe_3d_kernel(x_ref, pe_ref, o_ref):
    # x/o: (tile_b, tile_s, D); pe: (tile_s, D) broadcast over batch. dtypes already match.
    o_ref[...] = x_ref[...] + pe_ref[...][None, :, :]


def _add_pe_2d_kernel(x_ref, pe_ref, o_ref):
    # x/o: (tile_b, tile_l); pe: (1, tile_l) broadcast over batch (lane-fused seq*d axis).
    o_ref[...] = x_ref[...] + pe_ref[...]


def positional_encoding(x, pe, *, dropout_rate=0.0, target_block_bytes=2 << 20,
                        donate_x=False):
    """x: (B, S, D); pe: (max_len, D) precomputed table. Returns x + pe[:S] (eval-mode)."""
    # TODO(synk): only eval-mode / p=0 dropout (identity) is implemented.
    assert dropout_rate == 0.0, "training-mode dropout (p>0) not implemented in this kernel"
    B, S, D = x.shape
    assert pe.shape[0] >= S and pe.shape[1] == D

    itemsize = jnp.dtype(x.dtype).itemsize
    q = _sublane_quantum(x.dtype)
    io_aliases = {0: 0} if donate_x else {}

    if D % 128 == 0:
        # ---- lane-dense already: tile (batch, seq, D) with D whole on the lane axis ----
        # Pass the full pe table (no standalone slice copy); only cast when dtypes differ,
        # and then cast just the S rows actually needed (one small fused S*D copy).
        pe_in = pe if pe.dtype == x.dtype else pe[:S].astype(x.dtype)

        rows_budget = max(q, target_block_bytes // (D * itemsize))
        tile_s = S if rows_budget >= S else (rows_budget // q) * q
        tile_b = min(B, max(1, target_block_bytes // (tile_s * D * itemsize)))
        grid = (pl.cdiv(S, tile_s), pl.cdiv(B, tile_b))  # seq OUTER -> pe tile re-used

        in_specs = [
            pl.BlockSpec((tile_b, tile_s, D), lambda s, b: (b, s, 0)),  # x tile
            pl.BlockSpec((tile_s, D), lambda s, b: (s, 0)),             # pe tile
        ]
        out_spec = pl.BlockSpec((tile_b, tile_s, D), lambda s, b: (b, s, 0))
        kernel = _add_pe_3d_kernel
        x_in = x
        out_shape = jax.ShapeDtypeStruct((B, S, D), x.dtype)
        x_block_bytes = tile_b * tile_s * D * itemsize
        pe_block_bytes = tile_s * D * jnp.dtype(pe_in.dtype).itemsize
    else:
        # ---- small / odd d_model: fuse (seq, D) into one lane axis -> unmasked stores ----
        L = S * D
        x_in = x.reshape(B, L)
        pe_in = pe[:S].astype(x.dtype).reshape(1, L)  # tiny S*D copy; x traffic dominates

        tile_b = B if B <= 8 * q else 8 * q           # full dim or a multiple of 8
        tile_l = max(128, (target_block_bytes // (tile_b * itemsize)) // 128 * 128)
        if tile_l >= L:
            tile_l = L                                 # full dim is always legal
        grid = (pl.cdiv(L, tile_l), pl.cdiv(B, tile_b))  # lane axis OUTER -> pe tile re-used

        in_specs = [
            pl.BlockSpec((tile_b, tile_l), lambda l, b: (b, l)),  # x tile
            pl.BlockSpec((1, tile_l), lambda l, b: (0, l)),       # pe tile
        ]
        out_spec = pl.BlockSpec((tile_b, tile_l), lambda l, b: (b, l))
        kernel = _add_pe_2d_kernel
        out_shape = jax.ShapeDtypeStruct((B, L), x.dtype)
        x_block_bytes = tile_b * tile_l * itemsize
        pe_block_bytes = tile_l * itemsize

    # Explicit scoped-VMEM sizing: double-buffered x + out blocks, plus pe block, plus slack.
    vmem_need = 2 * (2 * x_block_bytes + pe_block_bytes) + (2 << 20)
    vmem_limit = int(min(max(vmem_need, 16 << 20), 48 << 20))

    out = pl.pallas_call(
        kernel,
        out_shape=out_shape,
        grid_spec=pltpu.PrefetchScalarGridSpec(
            num_scalar_prefetch=0,
            grid=grid,
            in_specs=in_specs,
            out_specs=out_spec,
        ),
        compiler_params=pltpu.CompilerParams(
            dimension_semantics=("parallel", "parallel"),
            vmem_limit_bytes=vmem_limit,
        ),
        cost_estimate=pl.CostEstimate(
            flops=B * S * D,
            transcendentals=0,
            bytes_accessed=2 * B * S * D * itemsize
            + S * D * jnp.dtype(pe_in.dtype).itemsize,
        ),
        input_output_aliases=io_aliases,
    )(x_in, pe_in)
    return out.reshape(B, S, D)


if __name__ == "__main__":
    key = jax.random.PRNGKey(0)
    k1, k2 = jax.random.split(key)

    # Case 1: small d_model (not a 128-multiple) -> lane-fused 2D path.
    batch, seq, d_model = 2, 8, 32
    x = jax.random.normal(k1, (batch, seq, d_model), dtype=jnp.float32)
    pe = make_positional_encoding_table(d_model, max_len=5000)
    out = jax.block_until_ready(positional_encoding(x, pe, dropout_rate=0.0))
    ref = x + pe[:seq][None, :, :]
    assert out.shape == (batch, seq, d_model)
    assert jnp.allclose(out, ref, atol=1e-6, rtol=1e-6), "mismatch vs reference (2D path)"

    # Case 2: d_model a multiple of 128 -> native 3D path (full-table pe, no wrapper slice).
    batch2, seq2, d_model2 = 2, 16, 128
    x2 = jax.random.normal(k2, (batch2, seq2, d_model2), dtype=jnp.float32)
    pe2 = make_positional_encoding_table(d_model2, max_len=5000)
    out2 = jax.block_until_ready(positional_encoding(x2, pe2, dropout_rate=0.0))
    ref2 = x2 + pe2[:seq2][None, :, :]
    assert out2.shape == (batch2, seq2, d_model2)
    assert jnp.allclose(out2, ref2, atol=1e-6, rtol=1e-6), "mismatch vs reference (3D path)"

    print("KERNEL_OK")
</pallas_src>

<mosaic_0001>
module attributes {stable_mosaic.version = 11 : i64} {
  func.func @_add_pe_2d_kernel(%arg0: i32, %arg1: i32, %arg2: memref<2x256xf32, #tpu.memory_space<vmem>>, %arg3: memref<1x256xf32, #tpu.memory_space<vmem>>, %arg4: memref<2x256xf32, #tpu.memory_space<vmem>>) attributes {dimension_semantics = [#tpu.dimension_semantics<parallel>, #tpu.dimension_semantics<parallel>], iteration_bounds = array<i64: 1, 1>, scalar_prefetch = 0 : i64, scratch_operands = 0 : i64, tpu.core_type = #tpu.core_type<tc>, window_params = [{transform_indices = @transform_0, window_bounds = array<i64: 2, 256>}, {transform_indices = @transform_1, window_bounds = array<i64: 1, 256>}, {transform_indices = @transform_2, window_bounds = array<i64: 2, 256>}]} {
    %c0 = arith.constant 0 : index
    %c0_0 = arith.constant 0 : index
    %0 = vector.load %arg2[%c0, %c0_0] : memref<2x256xf32, #tpu.memory_space<vmem>>, vector<2x256xf32>
    %c0_1 = arith.constant 0 : index
    %c0_2 = arith.constant 0 : index
    %1 = vector.load %arg3[%c0_1, %c0_2] : memref<1x256xf32, #tpu.memory_space<vmem>>, vector<1x256xf32>
    %2 = vector.broadcast %1 : vector<1x256xf32> to vector<2x256xf32>
    %3 = arith.addf %0, %2 : vector<2x256xf32>
    %c0_3 = arith.constant 0 : index
    %c0_4 = arith.constant 0 : index
    %4 = vector.load %arg4[%c0_3, %c0_4] : memref<2x256xf32, #tpu.memory_space<vmem>>, vector<2x256xf32>
    tpu.vector_store %arg4[%c0_3, %c0_4], %3 {strides = array<i32>} : memref<2x256xf32, #tpu.memory_space<vmem>>, vector<2x256xf32>,
    return
  }
  func.func @transform_0(%arg0: i32, %arg1: i32) -> (i32, i32) {
    %c0_i32 = arith.constant 0 : i32
    return %arg1, %arg0 : i32, i32
  }
  func.func @transform_1(%arg0: i32, %arg1: i32) -> (i32, i32) {
    %c0_i32 = arith.constant 0 : i32
    %c0_i32_0 = arith.constant 0 : i32
    return %c0_i32, %arg0 : i32, i32
  }
  func.func @transform_2(%arg0: i32, %arg1: i32) -> (i32, i32) {
    %c0_i32 = arith.constant 0 : i32
    return %arg1, %arg0 : i32, i32
  }
}

</mosaic_0001>

<llo_original>
// kernel: tpu_custom_call.1
$region0: #{tpu_custom_call.1}
  #allocation0 [shape = 'u32[]', space=smem, size = 0x4, offset = 0x4, fixed_abs, tag = 'smem constant byte address 0x4 - core index']
  #allocation1 [shape = 'u32[144,128]{1,0:T(1,128)}', space=vmem, size = 0x12000, scoped, tag = 'internal scratch']
  %s0 = inlined_call_operand.hbm [shape: f32[2,256], index: 0, kind: input, shape index: {}]
  %s1 = inlined_call_operand.vmem [shape: f32[1,256], index: 1, kind: input, shape index: {}]
  %s2 = inlined_call_operand.hbm [shape: f32[2,256], index: 2, kind: output, shape index: {}]
  %s3 = sld [smem:[#allocation0]]
  $region22: #{tpu_custom_call.1} parent=0
    _
  %s5 = ssub.s32 1, %s3
  %s6 = scalar_select 0, %s5, %s3
  $region1: #{tpu_custom_call.1} parent=0
    #allocation2 [shape = 'u8[2048]{0}', space=vmem, size = 0x800, scoped, tag = 'input window, operand 0, single buffered']
    #allocation3 [shape = 's32[1]{0}', space=sflag, size = 0x4, scoped, tag = 'scoped memory for tpu_custom_call.1']
    #allocation4 [shape = 's32[1]{0}', space=sflag, size = 0x4, scoped, tag = 'scoped memory for tpu_custom_call.1']
    #allocation5 [shape = 'u8[2048]{0}', space=vmem, size = 0x800, scoped, tag = 'output window, operand 0, single buffered']
    %7 = vsyncpa [#allocation3], 0
    %8 = vsyncpa [#allocation4], 0
    // Predicated region
    $region2: #{tpu_custom_call.1} parent=1 // pred_check
      _
    $region3: #{tpu_custom_call.1} parent=1 // pred_check_branch
      %10 = sbr.rel (0) target = $region5
    $region4: #{tpu_custom_call.1} parent=1 // pred_region
      %s12 = ssub.s32 64, 64
      %13 = vsyncadd [#allocation3], %s12
      %s15 = sshll.u32 [#allocation2], 4
      %s16 = int_to_ptr.vmem [resolvable:$true] %s15
      %18 = dma.hbm_to_vmem [thread:$0]  %s0, 64, %s16, [#allocation3]
    $region5: #{tpu_custom_call.1} parent=1 // pred_fallthru
      _
    // Predicated region
    $region6: #{tpu_custom_call.1} parent=1 // pred_check
      _
    $region7: #{tpu_custom_call.1} parent=1 // pred_check_branch
      %20 = sbr.rel (0) target = $region9
    $region8: #{tpu_custom_call.1} parent=1 // pred_region
      _
    $region9: #{tpu_custom_call.1} parent=1 // pred_fallthru
      _
    // Predicated region
    $region10: #{tpu_custom_call.1} parent=1 // pred_check
      _
    $region11: #{tpu_custom_call.1} parent=1 // pred_check_branch
      %22 = sbr.rel (0) target = $region13
    $region12: #{tpu_custom_call.1} parent=1 // pred_region
      %23 = dma.done [#allocation3], 64
    $region13: #{tpu_custom_call.1} parent=1 // pred_fallthru
      _
    %v24 = vld [vmem:[#allocation2] sm:$0xf]
    %v25 = vld [vmem:[%s1] sm:$0x3]
    %v27 = vlaneseq
    %v28 = vshrl.u32 %v27, 7
    %v29 = vsub.s32 0, %v28
    %v30 = vrot.slane %v25, %v29
    %v31 = vlaneseq
    %v32 = vshrl.u32 %v31, 7
    %v33 = vsub.s32 1, %v32
    %v34 = vrot.slane %v25, %v33
    %v35 = vcombine.low %v30, %v34
    %v37 = vunpack.c.l.s4 1983009808
    %v38 = vunpack.c.0.s8 %v37
    %v39 = vlaneseq
    %v40 = vshrl.u32 %v39, 7
    %v41 = vsub.s32 %v38, %v40
    %v42 = vrot.slane %v35, %v41
    %v44 = vadd.f32 %v24, %v42
    %45 = vst [vmem:[#allocation5] sm:$0xf] %v44
    // Predicated region
    $region14: #{tpu_custom_call.1} parent=1 // pred_check
      _
    $region15: #{tpu_custom_call.1} parent=1 // pred_check_branch
      %47 = sbr.rel (0) target = $region17
    $region16: #{tpu_custom_call.1} parent=1 // pred_region
      %s49 = ssub.s32 64, 64
      %50 = vsyncadd [#allocation4], %s49
      %s52 = sshll.u32 [#allocation5], 4
      %s53 = int_to_ptr.vmem [resolvable:$true] %s52
      %55 = dma.vmem_to_hbm [thread:$0]  %s53, 64, %s2, [#allocation4]
    $region17: #{tpu_custom_call.1} parent=1 // pred_fallthru
      _
    // Predicated region
    $region18: #{tpu_custom_call.1} parent=1 // pred_check
      _
    $region19: #{tpu_custom_call.1} parent=1 // pred_check_branch
      %57 = sbr.rel (0) target = $region21
    $region20: #{tpu_custom_call.1} parent=1 // pred_region
      %58 = dma.done [#allocation4], 64
    $region21: #{tpu_custom_call.1} parent=1 // pred_fallthru
      _
    %59 = vsyncpa [#allocation3], 1
    %60 = vsyncpa [#allocation4], 1

</llo_original>
